<compile_context>
chip_gen: v7x
topology: tpu7x:2x2x1
jax: 0.10.0
libtpu: 0.0.40
codegen_flags: <defaults>
</compile_context>

<pallas_src>
import jax
import jax.numpy as jnp
from jax.experimental import pallas as pl
from jax.experimental.pallas import tpu as pltpu


def _round_up(x, m):
    return ((x + m - 1) // m) * m


def _cdiv(a, b):
    return -(-a // b)


# --------------------------------------------------------------------------- #
# Kernel
# --------------------------------------------------------------------------- #
def glu_kernel(x_ref, wug_ref, wd_ref, o_ref, acc_ref):
    # x_ref:   (tm, dim)      token tile (same block across the hidden axis)
    # wug_ref: (dim, 2*th)    fused [up | gate] weight slice for hidden tile h
    # wd_ref:  (th, dim)      down-projection weight slice for hidden tile h
    # o_ref:   (tm, dim)      output tile (written on the last hidden step)
    # acc_ref: (tm, dim)      f32 accumulator scratch
    h = pl.program_id(1)
    th = wd_ref.shape[0]

    x = x_ref[...]
    # Single fused up/gate matmul -> (tm, 2*th) in f32.
    ug = jnp.dot(x, wug_ref[...], preferred_element_type=jnp.float32)
    up = ug[:, :th]
    gate = ug[:, th:]
    # SiLU(gate) * up : VPU elementwise, sigmoid on the EUP, all f32.
    act = (gate * jax.nn.sigmoid(gate)) * up
    partial = jnp.dot(act.astype(wd_ref.dtype), wd_ref[...],
                      preferred_element_type=jnp.float32)

    @pl.when(h == 0)
    def _():
        acc_ref[...] = partial          # init from first partial (no zero pass)

    @pl.when(h > 0)
    def _():
        acc_ref[...] += partial

    @pl.when(h == pl.num_programs(1) - 1)
    def _():
        o_ref[...] = acc_ref[...].astype(o_ref.dtype)


# --------------------------------------------------------------------------- #
# Wrapper
# --------------------------------------------------------------------------- #
def _vmem_capacity_bytes():
    try:
        return int(pltpu.get_tpu_info().vmem_capacity_bytes)
    except Exception:
        # Conservative fallback (v7x-sized) if the query is unavailable.
        return 64 << 20


def _default_tiles(vmem_cap):
    # 64 MiB parts (v7x): prefer tm over th within the tight budget.
    if vmem_cap <= (64 << 20) + (1 << 20):
        return 512, 256
    # 128 MiB parts (v5e / v6e): tm=1024 crosses the compute-bound threshold.
    return 1024, 512


def _vmem_estimate(tm, th, dim, x_bytes, w_bytes):
    return (tm * dim * 4                         # f32 accumulator
            + 2 * tm * dim * x_bytes             # x tile, double-buffered
            + 2 * tm * dim * x_bytes             # out tile, double-buffered
            + 2 * dim * (2 * th) * w_bytes       # fused up/gate slice, dbl-buf
            + 2 * th * dim * w_bytes)            # down slice, dbl-buf


def glu_forward(x, w_up, w_gate, w_down, *, tm=None, th=None,
                vmem_limit_bytes=None):
    """x: (batch, seq, dim). Weights (pre-transposed, torch W.T):
    w_up/w_gate: (dim, hidden), w_down: (hidden, dim)."""
    batch, seq, dim = x.shape
    hidden = w_up.shape[1]
    m = batch * seq

    x_bytes = jnp.dtype(x.dtype).itemsize
    w_bytes = jnp.dtype(w_up.dtype).itemsize

    vmem_cap = _vmem_capacity_bytes()
    vmem_budget = vmem_cap - (8 << 20)           # headroom below physical VMEM

    tm_def, th_def = _default_tiles(vmem_cap)
    tm = tm_def if tm is None else tm
    th = th_def if th is None else th

    # ---- hidden tile: lane-aligned, never degrades to full hidden ---------- #
    th_eff = max(128, (min(th, _round_up(hidden, 128)) // 128) * 128)
    hidden_pad = _round_up(hidden, th_eff)
    num_h = hidden_pad // th_eff

    # ---- token tile: >=2 tiles for the parallel axis when possible --------- #
    m8 = _round_up(m, 8)
    tm_eff = min(tm, m8)
    if m8 <= tm and m8 > 8:
        tm_eff = _round_up(_cdiv(m8, 2), 8)      # split so both TCs get work

    # ---- fit-check against physical VMEM ----------------------------------- #
    while (_vmem_estimate(tm_eff, th_eff, dim, x_bytes, w_bytes) > vmem_budget
           and tm_eff > 64):
        tm_eff = _round_up(tm_eff // 2, 8)
    while (_vmem_estimate(tm_eff, th_eff, dim, x_bytes, w_bytes) > vmem_budget
           and th_eff > 128):
        th_eff = max(128, (th_eff // 2 // 128) * 128)
        hidden_pad = _round_up(hidden, th_eff)
        num_h = hidden_pad // th_eff

    m_pad = _round_up(m8, tm_eff)
    grid = (m_pad // tm_eff, num_h)

    # ---- build padded / fused operands ------------------------------------- #
    x2d = x.reshape(m, dim)
    if m_pad != m:
        x2d = jnp.pad(x2d, ((0, m_pad - m), (0, 0)))

    pad_h = hidden_pad - hidden
    w_up_p = jnp.pad(w_up, ((0, 0), (0, pad_h))) if pad_h else w_up
    w_gate_p = jnp.pad(w_gate, ((0, 0), (0, pad_h))) if pad_h else w_gate
    w_down_p = jnp.pad(w_down, ((0, pad_h), (0, 0))) if pad_h else w_down

    # Tile-interleave up/gate so hidden block h covers columns
    # [h*2*th, h*2*th+th) = up tile h  and  [h*2*th+th, (h+1)*2*th) = gate tile h.
    wu3 = w_up_p.reshape(dim, num_h, th_eff)
    wg3 = w_gate_p.reshape(dim, num_h, th_eff)
    w_ug = jnp.concatenate([wu3, wg3], axis=2).reshape(dim, num_h * 2 * th_eff)

    # ---- VMEM limit (clamped below physical) ------------------------------- #
    est = _vmem_estimate(tm_eff, th_eff, dim, x_bytes, w_bytes)
    if vmem_limit_bytes is None:
        vmem_limit_bytes = int(min(max(int(1.5 * est), 32 << 20), vmem_budget))
    vmem_limit_bytes = int(min(vmem_limit_bytes, vmem_budget))

    cost = pl.CostEstimate(
        flops=int(6 * m_pad * dim * hidden_pad),
        transcendentals=int(m_pad * hidden_pad),
        bytes_accessed=int(2 * m_pad * dim * x_bytes
                           + grid[0] * 3 * dim * hidden_pad * w_bytes),
    )

    out2d = pl.pallas_call(
        glu_kernel,
        out_shape=jax.ShapeDtypeStruct((m_pad, dim), x.dtype),
        grid_spec=pltpu.PrefetchScalarGridSpec(
            num_scalar_prefetch=0,
            grid=grid,
            in_specs=[
                pl.BlockSpec((tm_eff, dim), lambda i, h: (i, 0)),        # x tile
                pl.BlockSpec((dim, 2 * th_eff), lambda i, h: (0, h)),    # [up|gate]
                pl.BlockSpec((th_eff, dim), lambda i, h: (h, 0)),        # W_down
            ],
            out_specs=pl.BlockSpec((tm_eff, dim), lambda i, h: (i, 0)),
            scratch_shapes=[pltpu.VMEM((tm_eff, dim), jnp.float32)],
        ),
        compiler_params=pltpu.CompilerParams(
            dimension_semantics=("parallel", "arbitrary"),
            vmem_limit_bytes=vmem_limit_bytes,
        ),
        cost_estimate=cost,
    )(x2d, w_ug, w_down_p)

    if m_pad != m:
        out2d = out2d[:m]
    return out2d.reshape(batch, seq, dim)


# --------------------------------------------------------------------------- #
# Module helpers (match the PyTorch spec)
# --------------------------------------------------------------------------- #
def _glu_hidden_dim(dim, multiple_of=4):
    hidden_dim = 4 * dim
    hidden_dim = int(2 * hidden_dim / 3)
    hidden_dim = multiple_of * ((hidden_dim + multiple_of - 1) // multiple_of)
    return hidden_dim


def _trunc_normal(key, shape, std):
    # matches nn.init.trunc_normal_(mean=0, std=std, a=-3*std, b=3*std)
    return std * jax.random.truncated_normal(key, -3.0, 3.0, shape, jnp.float32)


if __name__ == "__main__":
    # Small smoke test, lane-aligned: dim=128, multiple_of=128 -> hidden=384.
    batch, seq, dim = 2, 8, 128
    multiple_of = 128
    hidden = _glu_hidden_dim(dim, multiple_of)   # = 384

    key = jax.random.PRNGKey(0)
    kx, ku, kg, kd = jax.random.split(key, 4)

    x = jax.random.normal(kx, (batch, seq, dim), jnp.float32)

    in_std = dim ** -0.5
    out_std = hidden ** -0.5
    # PyTorch Linear weights are (out, in); stored transposed (in, out) here.
    w_up = _trunc_normal(ku, (dim, hidden), in_std)
    w_gate = _trunc_normal(kg, (dim, hidden), in_std)
    w_down = _trunc_normal(kd, (hidden, dim), out_std)

    # f32 path; th=128 forces grid=(2, 3): exercises both the parallel token
    # split and the hidden-tiled accumulation.
    out = glu_forward(x, w_up, w_gate, w_down, th=128)
    out = jax.block_until_ready(out)

    up_r = x @ w_up
    gate_r = x @ w_gate
    ref = (jax.nn.silu(gate_r) * up_r) @ w_down
    assert out.shape == (batch, seq, dim)
    assert jnp.allclose(out, ref, atol=1e-4, rtol=1e-4)

    # Non-divisible hidden path: default th (256/512) forces zero-padding of the
    # hidden dim -> exercises the padded remainder handling.
    out_pad = jax.block_until_ready(glu_forward(x, w_up, w_gate, w_down))
    assert jnp.allclose(out_pad, ref, atol=1e-4, rtol=1e-4)

    # bf16 weights/activations (production dtype): f32 accumulation inside.
    xb = x.astype(jnp.bfloat16)
    wub = w_up.astype(jnp.bfloat16)
    wgb = w_gate.astype(jnp.bfloat16)
    wdb = w_down.astype(jnp.bfloat16)
    out_bf16 = jax.block_until_ready(glu_forward(xb, wub, wgb, wdb, th=128))

    up_b = xb.astype(jnp.float32) @ wub.astype(jnp.float32)
    gate_b = xb.astype(jnp.float32) @ wgb.astype(jnp.float32)
    ref_b = (jax.nn.silu(gate_b) * up_b) @ wdb.astype(jnp.float32)
    assert jnp.allclose(out_bf16.astype(jnp.float32), ref_b, atol=5e-2, rtol=5e-2)

    # TODO(synk): dropout is identity here (module default dropout=None); a
    # stochastic dropout path would use pltpu.prng_seed / prng_random_bits.
    print("KERNEL_OK")
</pallas_src>

<mosaic_0001>
module attributes {stable_mosaic.version = 11 : i64} {
  func.func @glu_kernel(%arg0: i32, %arg1: i32, %arg2: memref<8x128xf32, #tpu.memory_space<vmem>>, %arg3: memref<128x256xf32, #tpu.memory_space<vmem>>, %arg4: memref<128x128xf32, #tpu.memory_space<vmem>>, %arg5: memref<8x128xf32, #tpu.memory_space<vmem>>, %arg6: memref<8x128xf32, #tpu.memory_space<vmem>>) attributes {dimension_semantics = [#tpu.dimension_semantics<parallel>, #tpu.dimension_semantics<arbitrary>], iteration_bounds = array<i64: 2, 3>, scalar_prefetch = 0 : i64, scratch_operands = 1 : i64, tpu.core_type = #tpu.core_type<tc>, window_params = [{transform_indices = @transform_0, window_bounds = array<i64: 8, 128>}, {transform_indices = @transform_1, window_bounds = array<i64: 128, 256>}, {transform_indices = @transform_2, window_bounds = array<i64: 128, 128>}, {transform_indices = @transform_3, window_bounds = array<i64: 8, 128>}]} {
    %c0 = arith.constant 0 : index
    %c0_0 = arith.constant 0 : index
    %0 = vector.load %arg2[%c0, %c0_0] : memref<8x128xf32, #tpu.memory_space<vmem>>, vector<8x128xf32>
    %c0_1 = arith.constant 0 : index
    %c0_2 = arith.constant 0 : index
    %1 = vector.load %arg3[%c0_1, %c0_2] : memref<128x256xf32, #tpu.memory_space<vmem>>, vector<128x256xf32>
    %cst = arith.constant dense<0.000000e+00> : vector<8x256xf32>
    %2 = tpu.matmul %0, %1, %cst {dimension_numbers = #tpu.dot_dimension_numbers<[1], [0], [0], [1], [0, 0, 1, 1], [], []>} : vector<8x128xf32>, vector<128x256xf32>, vector<8x256xf32> -> vector<8x256xf32>
    %3 = vector.extract_strided_slice %2 {offsets = [0, 0], sizes = [8, 128], strides = [1, 1]} : vector<8x256xf32> to vector<8x128xf32>
    %4 = vector.extract_strided_slice %2 {offsets = [0, 128], sizes = [8, 128], strides = [1, 1]} : vector<8x256xf32> to vector<8x128xf32>
    %5 = arith.negf %4 : vector<8x128xf32>
    %6 = math.exp %5 : vector<8x128xf32>
    %cst_3 = arith.constant 1.000000e+00 : f32
    %7 = vector.broadcast %cst_3 : f32 to vector<8x128xf32>
    %8 = arith.addf %7, %6 : vector<8x128xf32>
    %9 = arith.divf %7, %8 : vector<8x128xf32>
    %10 = arith.mulf %4, %9 : vector<8x128xf32>
    %11 = arith.mulf %10, %3 : vector<8x128xf32>
    %c0_4 = arith.constant 0 : index
    %c0_5 = arith.constant 0 : index
    %12 = vector.load %arg4[%c0_4, %c0_5] : memref<128x128xf32, #tpu.memory_space<vmem>>, vector<128x128xf32>
    %cst_6 = arith.constant dense<0.000000e+00> : vector<8x128xf32>
    %13 = tpu.matmul %11, %12, %cst_6 {dimension_numbers = #tpu.dot_dimension_numbers<[1], [0], [0], [1], [0, 0, 1, 1], [], []>} : vector<8x128xf32>, vector<128x128xf32>, vector<8x128xf32> -> vector<8x128xf32>
    %c0_i32 = arith.constant 0 : i32
    %14 = arith.cmpi eq, %arg1, %c0_i32 : i32
    %15 = arith.extui %14 : i1 to i32
    %c0_i32_7 = arith.constant 0 : i32
    %16 = arith.cmpi ne, %15, %c0_i32_7 : i32
    scf.if %16 {
      %c0_11 = arith.constant 0 : index
      %c0_12 = arith.constant 0 : index
      %23 = vector.load %arg6[%c0_11, %c0_12] : memref<8x128xf32, #tpu.memory_space<vmem>>, vector<8x128xf32>
      tpu.vector_store %arg6[%c0_11, %c0_12], %13 {strides = array<i32>} : memref<8x128xf32, #tpu.memory_space<vmem>>, vector<8x128xf32>,
    } else {
    }
    %c0_i32_8 = arith.constant 0 : i32
    %17 = arith.cmpi sgt, %arg1, %c0_i32_8 : i32
    %18 = arith.extui %17 : i1 to i32
    %c0_i32_9 = arith.constant 0 : i32
    %19 = arith.cmpi ne, %18, %c0_i32_9 : i32
    scf.if %19 {
      %c0_11 = arith.constant 0 : index
      %c0_12 = arith.constant 0 : index
      %23 = vector.load %arg6[%c0_11, %c0_12] : memref<8x128xf32, #tpu.memory_space<vmem>>, vector<8x128xf32>
      %24 = arith.addf %23, %13 : vector<8x128xf32>
      %c0_13 = arith.constant 0 : index
      %c0_14 = arith.constant 0 : index
      %25 = vector.load %arg6[%c0_13, %c0_14] : memref<8x128xf32, #tpu.memory_space<vmem>>, vector<8x128xf32>
      tpu.vector_store %arg6[%c0_13, %c0_14], %24 {strides = array<i32>} : memref<8x128xf32, #tpu.memory_space<vmem>>, vector<8x128xf32>,
    } else {
    }
    %c2_i32 = arith.constant 2 : i32
    %20 = arith.cmpi eq, %arg1, %c2_i32 : i32
    %21 = arith.extui %20 : i1 to i32
    %c0_i32_10 = arith.constant 0 : i32
    %22 = arith.cmpi ne, %21, %c0_i32_10 : i32
    scf.if %22 {
      %c0_11 = arith.constant 0 : index
      %c0_12 = arith.constant 0 : index
      %23 = vector.load %arg6[%c0_11, %c0_12] : memref<8x128xf32, #tpu.memory_space<vmem>>, vector<8x128xf32>
      %c0_13 = arith.constant 0 : index
      %c0_14 = arith.constant 0 : index
      %24 = vector.load %arg5[%c0_13, %c0_14] : memref<8x128xf32, #tpu.memory_space<vmem>>, vector<8x128xf32>
      tpu.vector_store %arg5[%c0_13, %c0_14], %23 {strides = array<i32>} : memref<8x128xf32, #tpu.memory_space<vmem>>, vector<8x128xf32>,
    } else {
    }
    return
  }
  func.func @transform_0(%arg0: i32, %arg1: i32) -> (i32, i32) {
    %c0_i32 = arith.constant 0 : i32
    %c0_i32_0 = arith.constant 0 : i32
    return %arg0, %c0_i32 : i32, i32
  }
  func.func @transform_1(%arg0: i32, %arg1: i32) -> (i32, i32) {
    %c0_i32 = arith.constant 0 : i32
    %c0_i32_0 = arith.constant 0 : i32
    return %c0_i32, %arg1 : i32, i32
  }
  func.func @transform_2(%arg0: i32, %arg1: i32) -> (i32, i32) {
    %c0_i32 = arith.constant 0 : i32
    %c0_i32_0 = arith.constant 0 : i32
    return %arg1, %c0_i32 : i32, i32
  }
  func.func @transform_3(%arg0: i32, %arg1: i32) -> (i32, i32) {
    %c0_i32 = arith.constant 0 : i32
    %c0_i32_0 = arith.constant 0 : i32
    return %arg0, %c0_i32 : i32, i32
  }
}

</mosaic_0001>

<llo_original>
// kernel: tpu_custom_call.1
$region0: #{tpu_custom_call.1}
  #allocation0 [shape = 'u32[]', space=smem, size = 0x4, offset = 0x4, fixed_abs, tag = 'smem constant byte address 0x4 - core index']
  #allocation1 [shape = 'u32[144,128]{1,0:T(1,128)}', space=vmem, size = 0x12000, scoped, tag = 'internal scratch']
  #allocation2 [shape = 'f32[8,128]{1,0:T(8,128)}', space=vmem, size = 0x1000, scoped, tag = 'scratch operand']
  %s0 = inlined_call_operand.hbm [shape: f32[16,128], index: 0, kind: input, shape index: {}]
  %s1 = inlined_call_operand.hbm [shape: f32[128,768], index: 1, kind: input, shape index: {}]
  %s2 = inlined_call_operand.hbm [shape: f32[384,128], index: 2, kind: input, shape index: {}]
  %s3 = inlined_call_operand.hbm [shape: f32[16,128], index: 3, kind: output, shape index: {}]
  %s4 = sld [smem:[#allocation0]]
  $region69: #{tpu_custom_call.1} parent=0
    _
  %s6 = ssub.s32 1, %s4
  %s7 = scalar_select 0, %s6, %s4
  $region1: #{tpu_custom_call.1} parent=0
    #allocation3 [shape = 'u8[8192]{0}', space=vmem, size = 0x2000, scoped, tag = 'input window, operand 0']
    #allocation4 [shape = 's32[2]{0}', space=sflag, size = 0x8, scoped, tag = 'scoped memory for tpu_custom_call.1']
    #allocation5 [shape = 's32[2]{0}', space=sflag, size = 0x8, scoped, tag = 'scoped memory for tpu_custom_call.1']
    #allocation6 [shape = 'u8[262144]{0}', space=vmem, size = 0x40000, scoped, tag = 'input window, operand 1']
    #allocation7 [shape = 's32[2]{0}', space=sflag, size = 0x8, scoped, tag = 'scoped memory for tpu_custom_call.1']
    #allocation8 [shape = 'u8[131072]{0}', space=vmem, size = 0x20000, scoped, tag = 'input window, operand 2']
    #allocation9 [shape = 'u8[8192]{0}', space=vmem, size = 0x2000, scoped, tag = 'output window, operand 0']
    %8 = vsyncpa [#allocation4], 0
    %s9 = scalar_lea.sflag [#allocation4], 1
    %10 = vsyncpa %s9, 0
    %11 = vsyncpa [#allocation7], 0
    %s12 = scalar_lea.sflag [#allocation7], 1
    %13 = vsyncpa %s12, 0
    %14 = vsyncpa [#allocation5], 0
    %s15 = scalar_lea.sflag [#allocation5], 1
    %16 = vsyncpa %s15, 0
    loop: start=0, step=1, limit=8
    $region2: #{tpu_custom_call.1} parent=1 // loop_pre_header
      _
    $region3: #{tpu_custom_call.1} parent=1 // loop_header
      %s18 = sphi 0, %s22
      %p19 = scmp.ge.s32.totalorder %s18, 8
      %s25 = sphi 0, %s37
      %s26 = sphi 0, %s33
      %s27 = sphi 0, %s25
      %s28 = sphi 0, %s26
      %s29 = sphi 0, %s27
      %s30 = sphi 0, %s28
      %s40 = sphi 0, %s42
      %s43 = sphi 0, %s40
      %s44 = sphi 0, %s43
      %s60 = sphi 0, %s44
      %s66 = sphi 0, %s68
      %s69 = sphi 0, %s66
      %s70 = sphi 0, %s69
      %s86 = sphi 0, %s70
      %s92 = sphi 0, %s94
      %s95 = sphi 0, %s92
      %s96 = sphi 0, %s95
      %s112 = sphi 0, %s96
      %s118 = sphi 0, %s120
      %s121 = sphi 0, %s118
      %s122 = sphi 0, %s121
      %s138 = sphi 0, %s122
    $region4: #{tpu_custom_call.1} parent=1 // loop_header_branch
      %21 = sbr.rel (%p19) target = $region8
    $region5: #{tpu_custom_call.1} parent=1 // loop_body
      %s23 = ssub.s32 %s18, 1
      %s24 = ssub.s32 %s18, 2
      %s31 = sadd.s32 1, %s26
      %p32 = scmp.ge.s32.totalorder %s31, 3
      %s33 = scalar_select %p32, 0, %s31
      %s34 = sadd.s32 1, %s25
      %s35 = scalar_select %p32, %s34, %s25
      %p36 = scmp.ge.s32.totalorder %s35, 2
      %s37 = scalar_select %p36, 0, %s35
      %s38 = ssub.s32 %s25, %s37
      %p39 = scmp.eq.s32.totalorder %s38, 0
      %s41 = sadd.s32 %s40, 1
      %s42 = scalar_select %p39, %s40, %s41
      %p45 = pneg %p39
      %p46 = scmp.eq.s32.totalorder %s18, 5
      %p47 = por %p45, %p46
      %p48 = scmp.ne.s32.totalorder %s40, %s43
      %p49 = scmp.eq.s32.totalorder %s18, 0
      %p50 = por %p48, %p49
      %p51 = scmp.ne.s32.totalorder %s40, %s43
      %p52 = scmp.eq.s32.totalorder %s23, 5
      %p53 = por %p51, %p52
      %p54 = scmp.ne.s32.totalorder %s43, %s44
      %p55 = scmp.eq.s32.totalorder %s23, 0
      %p56 = por %p54, %p55
      %p57 = scmp.ne.s32.totalorder %s43, %s44
      %p58 = scmp.eq.s32.totalorder %s24, 5
      %p59 = por %p57, %p58
      %p61 = scmp.ne.s32.totalorder %s44, %s60
      %p62 = scmp.eq.s32.totalorder %s24, 0
      %p63 = por %p61, %p62
      %s64 = ssub.s32 %s26, %s33
      %p65 = scmp.eq.s32.totalorder %s64, 0
      %s67 = sadd.s32 %s66, 1
      %s68 = scalar_select %p65, %s66, %s67
      %p71 = pneg %p65
      %p72 = scmp.eq.s32.totalorder %s18, 5
      %p73 = por %p71, %p72
      %p74 = scmp.ne.s32.totalorder %s66, %s69
      %p75 = scmp.eq.s32.totalorder %s18, 0
      %p76 = por %p74, %p75
      %p77 = scmp.ne.s32.totalorder %s66, %s69
      %p78 = scmp.eq.s32.totalorder %s23, 5
      %p79 = por %p77, %p78
      %p80 = scmp.ne.s32.totalorder %s69, %s70
      %p81 = scmp.eq.s32.totalorder %s23, 0
      %p82 = por %p80, %p81
      %p83 = scmp.ne.s32.totalorder %s69, %s70
      %p84 = scmp.eq.s32.totalorder %s24, 5
      %p85 = por %p83, %p84
      %p87 = scmp.ne.s32.totalorder %s70, %s86
      %p88 = scmp.eq.s32.totalorder %s24, 0
      %p89 = por %p87, %p88
      %s90 = ssub.s32 %s26, %s33
      %p91 = scmp.eq.s32.totalorder %s90, 0
      %s93 = sadd.s32 %s92, 1
      %s94 = scalar_select %p91, %s92, %s93
      %p97 = pneg %p91
      %p98 = scmp.eq.s32.totalorder %s18, 5
      %p99 = por %p97, %p98
      %p100 = scmp.ne.s32.totalorder %s92, %s95
      %p101 = scmp.eq.s32.totalorder %s18, 0
      %p102 = por %p100, %p101
      %p103 = scmp.ne.s32.totalorder %s92, %s95
      %p104 = scmp.eq.s32.totalorder %s23, 5
      %p105 = por %p103, %p104
      %p106 = scmp.ne.s32.totalorder %s95, %s96
      %p107 = scmp.eq.s32.totalorder %s23, 0
      %p108 = por %p106, %p107
      %p109 = scmp.ne.s32.totalorder %s95, %s96
      %p110 = scmp.eq.s32.totalorder %s24, 5
      %p111 = por %p109, %p110
      %p113 = scmp.ne.s32.totalorder %s96, %s112
      %p114 = scmp.eq.s32.totalorder %s24, 0
      %p115 = por %p113, %p114
      %s116 = ssub.s32 %s25, %s37
      %p117 = scmp.eq.s32.totalorder %s116, 0
      %s119 = sadd.s32 %s118, 1
      %s120 = scalar_select %p117, %s118, %s119
      %p123 = pneg %p117
      %p124 = scmp.eq.s32.totalorder %s18, 5
      %p125 = por %p123, %p124
      %p126 = scmp.ne.s32.totalorder %s118, %s121
      %p127 = scmp.eq.s32.totalorder %s18, 0
      %p128 = por %p126, %p127
      %p129 = scmp.ne.s32.totalorder %s118, %s121
      %p130 = scmp.eq.s32.totalorder %s23, 5
      %p131 = por %p129, %p130
      %p132 = scmp.ne.s32.totalorder %s121, %s122
      %p133 = scmp.eq.s32.totalorder %s23, 0
      %p134 = por %p132, %p133
      %p135 = scmp.ne.s32.totalorder %s121, %s122
      %p136 = scmp.eq.s32.totalorder %s24, 5
      %p137 = por %p135, %p136
      %p139 = scmp.ne.s32.totalorder %s122, %s138
      %p140 = scmp.eq.s32.totalorder %s24, 0
      %p141 = por %p139, %p140
      %p142 = scmp.le.s32.totalorder 1, %s18
      %p143 = scmp.lt.s32.totalorder %s18, 7
      %p144 = pnand %p142, %p143
      %p145 = pneg %p144
      // Predicated region
      $region9: #{tpu_custom_call.1} parent=5 // pred_check
        _
      $region10: #{tpu_custom_call.1} parent=5 // pred_check_branch
        %147 = sbr.rel (%p144) target = $region12
      $region11: #{tpu_custom_call.1} parent=5 // pred_region
        %s148 = ssub.s32 %s18, 1
      $region12: #{tpu_custom_call.1} parent=5 // pred_fallthru
        _
      %p149 = scmp.lt.s32.totalorder %s18, 6
      // Predicated region
      $region13: #{tpu_custom_call.1} parent=5 // pred_check
        %p150 = pneg %p149
      $region14: #{tpu_custom_call.1} parent=5 // pred_check_branch
        %152 = sbr.rel (%p150) target = $region16
      $region15: #{tpu_custom_call.1} parent=5 // pred_region
        // Predicated region
        $region17: #{tpu_custom_call.1} parent=15 // pred_check
          %p153 = pneg %p50
        $region18: #{tpu_custom_call.1} parent=15 // pred_check_branch
          %155 = sbr.rel (%p153) target = $region20
        $region19: #{tpu_custom_call.1} parent=15 // pred_region
          %s156 = sand.u32 %s40, 1
          %s157 = scalar_lea.sflag [#allocation4], %s156
          %s158 = sand.u32 %s40, 1
          %s159 = smul.addr %s158, 8
          %s160 = scalar_lea.vmem [#allocation3], %s159
          %s162 = ssub.s32 128, 128
          %163 = vsyncadd %s157, %s162
          %s164 = smul.addr %s25, 128
          %s165 = scalar_lea.hbm %s0, %s164
          %s167 = sshll.u32 %s160, 4
          %s168 = int_to_ptr.vmem [resolvable:$true] %s167
          %170 = dma.hbm_to_vmem [thread:$0]  %s165, 128, %s168, %s157
        $region20: #{tpu_custom_call.1} parent=15 // pred_fallthru
          _
        // Predicated region
        $region21: #{tpu_custom_call.1} parent=15 // pred_check
          %p171 = pneg %p76
        $region22: #{tpu_custom_call.1} parent=15 // pred_check_branch
          %173 = sbr.rel (%p171) target = $region24
        $region23: #{tpu_custom_call.1} parent=15 // pred_region
          %s174 = sand.u32 %s18, 1
          %s175 = scalar_lea.sflag [#allocation7], %s174
          %s176 = sand.u32 %s66, 1
          %s177 = smul.addr %s176, 256
          %s178 = scalar_lea.vmem [#allocation6], %s177
          %s179 = smul.u32 2, %s26
          %s181 = ssub.s32 4096, 4096
          %182 = vsyncadd %s175, %s181
          %s183 = smul.addr %s179, 128
          %s184 = scalar_lea.hbm %s1, %s183
          %s185 = sshll.u32 %s178, 4
          %s186 = int_to_ptr.vmem [resolvable:$true] %s185
          %191 = dma.hbm_to_vmem [thread:$0]  %s184, 4096, %s186, %s175, 768, 256, 16
        $region24: #{tpu_custom_call.1} parent=15 // pred_fallthru
          _
        // Predicated region
        $region25: #{tpu_custom_call.1} parent=15 // pred_check
          %p192 = pneg %p102
        $region26: #{tpu_custom_call.1} parent=15 // pred_check_branch
          %194 = sbr.rel (%p192) target = $region28
        $region27: #{tpu_custom_call.1} parent=15 // pred_region
          %s195 = sand.u32 %s18, 1
          %s196 = scalar_lea.sflag [#allocation7], %s195
          %s197 = sand.u32 %s92, 1
          %s198 = smul.addr %s197, 128
          %s199 = scalar_lea.vmem [#allocation8], %s198
          %s200 = smul.u32 16, %s26
          %s202 = ssub.s32 2048, 2048
          %203 = vsyncadd %s196, %s202
          %s204 = smul.addr %s200, 128
          %s205 = scalar_lea.hbm %s2, %s204
          %s206 = sshll.u32 %s199, 4
          %s207 = int_to_ptr.vmem [resolvable:$true] %s206
          %212 = dma.hbm_to_vmem [thread:$0]  %s205, 2048, %s207, %s196, 128, 128, 8
        $region28: #{tpu_custom_call.1} parent=15 // pred_fallthru
          _
      $region16: #{tpu_custom_call.1} parent=5 // pred_fallthru
        _
      %p213 = scmp.le.s32.totalorder 1, %s18
      %p214 = scmp.lt.s32.totalorder %s18, 7
      %p215 = pnand %p213, %p214
      %p216 = pneg %p215
      // Predicated region
      $region29: #{tpu_custom_call.1} parent=5 // pred_check
        _
      $region30: #{tpu_custom_call.1} parent=5 // pred_check_branch
        %218 = sbr.rel (%p215) target = $region32
      $region31: #{tpu_custom_call.1} parent=5 // pred_region
        %s219 = ssub.s32 %s18, 1
        %s220 = sand.u32 %s43, 1
        %s221 = scalar_lea.sflag [#allocation4], %s220
        %s222 = sand.u32 %s43, 1
        %s223 = smul.addr %s222, 8
        %s224 = scalar_lea.vmem [#allocation3], %s223
        // Predicated region
        $region33: #{tpu_custom_call.1} parent=31 // pred_check
          %p225 = pneg %p56
        $region34: #{tpu_custom_call.1} parent=31 // pred_check_branch
          %227 = sbr.rel (%p225) target = $region36
        $region35: #{tpu_custom_call.1} parent=31 // pred_region
          %228 = dma.done %s221, 128
        $region36: #{tpu_custom_call.1} parent=31 // pred_fallthru
          _
        %s229 = sand.u32 %s23, 1
        %s230 = scalar_lea.sflag [#allocation7], %s229
        %s231 = sand.u32 %s69, 1
        %s232 = smul.addr %s231, 256
        %s233 = scalar_lea.vmem [#allocation6], %s232
        // Predicated region
        $region37: #{tpu_custom_call.1} parent=31 // pred_check
          %p234 = pneg %p82
        $region38: #{tpu_custom_call.1} parent=31 // pred_check_branch
          %236 = sbr.rel (%p234) target = $region40
        $region39: #{tpu_custom_call.1} parent=31 // pred_region
          %237 = dma.done %s230, 4096
        $region40: #{tpu_custom_call.1} parent=31 // pred_fallthru
          _
        %s238 = sand.u32 %s23, 1
        %s239 = scalar_lea.sflag [#allocation7], %s238
        %s240 = sand.u32 %s95, 1
        %s241 = smul.addr %s240, 128
        %s242 = scalar_lea.vmem [#allocation8], %s241
        // Predicated region
        $region41: #{tpu_custom_call.1} parent=31 // pred_check
          %p243 = pneg %p108
        $region42: #{tpu_custom_call.1} parent=31 // pred_check_branch
          %245 = sbr.rel (%p243) target = $region44
        $region43: #{tpu_custom_call.1} parent=31 // pred_region
          %246 = dma.done %s239, 2048
        $region44: #{tpu_custom_call.1} parent=31 // pred_fallthru
          _
        %s247 = sand.u32 %s43, 1
        %s248 = scalar_lea.sflag [#allocation4], %s247
        %s249 = sand.u32 %s43, 1
        %s250 = smul.addr %s249, 8
        %s251 = scalar_lea.vmem [#allocation3], %s250
        %p252 = pneg %p56
        %p253 = pneg %p53
        %s254 = sand.u32 %s23, 1
        %s255 = scalar_lea.sflag [#allocation7], %s254
        %s256 = sand.u32 %s69, 1
        %s257 = smul.addr %s256, 256
        %s258 = scalar_lea.vmem [#allocation6], %s257
        %p259 = pneg %p82
        %p260 = pneg %p79
        %s261 = sand.u32 %s23, 1
        %s262 = scalar_lea.sflag [#allocation7], %s261
        %s263 = sand.u32 %s95, 1
        %s264 = smul.addr %s263, 128
        %s265 = scalar_lea.vmem [#allocation8], %s264
        %p266 = pneg %p108
        %p267 = pneg %p105
        %p268 = pneg %p134
        %p269 = pneg %p131
        %s270 = sand.u32 %s121, 1
        %s271 = scalar_lea.sflag [#allocation5], %s270
        %s272 = sand.u32 %s121, 1
        %s273 = smul.addr %s272, 8
        %s274 = scalar_lea.vmem [#allocation9], %s273
        %s275 = smul.u32 2, %s28
        %s276 = smul.u32 16, %s28
        %v277 = vld [vmem:[%s224] sm:$0xff]
        %v278 = vld [vmem:[%s233] sm:$0xff]
        %v279 = vld [vmem:[%s233 + $0x8] sm:$0xff]
        %v280 = vld [vmem:[%s233 + $0x10] sm:$0xff]
        %v281 = vld [vmem:[%s233 + $0x18] sm:$0xff]
        %v282 = vld [vmem:[%s233 + $0x20] sm:$0xff]
        %v283 = vld [vmem:[%s233 + $0x28] sm:$0xff]
        %v284 = vld [vmem:[%s233 + $0x30] sm:$0xff]
        %v285 = vld [vmem:[%s233 + $0x38] sm:$0xff]
        %v286 = vld [vmem:[%s233 + $0x40] sm:$0xff]
        %v287 = vld [vmem:[%s233 + $0x48] sm:$0xff]
        %v288 = vld [vmem:[%s233 + $0x50] sm:$0xff]
        %v289 = vld [vmem:[%s233 + $0x58] sm:$0xff]
        %v290 = vld [vmem:[%s233 + $0x60] sm:$0xff]
        %v291 = vld [vmem:[%s233 + $0x68] sm:$0xff]
        %v292 = vld [vmem:[%s233 + $0x70] sm:$0xff]
        %v293 = vld [vmem:[%s233 + $0x78] sm:$0xff]
        %v294 = vld [vmem:[%s233 + $0x80] sm:$0xff]
        %v295 = vld [vmem:[%s233 + $0x88] sm:$0xff]
        %v296 = vld [vmem:[%s233 + $0x90] sm:$0xff]
        %v297 = vld [vmem:[%s233 + $0x98] sm:$0xff]
        %v298 = vld [vmem:[%s233 + $0xa0] sm:$0xff]
        %v299 = vld [vmem:[%s233 + $0xa8] sm:$0xff]
        %v300 = vld [vmem:[%s233 + $0xb0] sm:$0xff]
        %v301 = vld [vmem:[%s233 + $0xb8] sm:$0xff]
        %v302 = vld [vmem:[%s233 + $0xc0] sm:$0xff]
        %v303 = vld [vmem:[%s233 + $0xc8] sm:$0xff]
        %v304 = vld [vmem:[%s233 + $0xd0] sm:$0xff]
        %v305 = vld [vmem:[%s233 + $0xd8] sm:$0xff]
        %v306 = vld [vmem:[%s233 + $0xe0] sm:$0xff]
        %v307 = vld [vmem:[%s233 + $0xe8] sm:$0xff]
        %v308 = vld [vmem:[%s233 + $0xf0] sm:$0xff]
        %v309 = vld [vmem:[%s233 + $0xf8] sm:$0xff]
        %310 = vmatprep.subr.mxu0 %v279
        %311 = vmatpush1.msra.mxu0 %v278
        %312 = vmatprep.subr.mxu0 %v281
        %313 = vmatpush1.msra.mxu0 %v280
        %314 = vmatprep.subr.mxu0 %v283
        %315 = vmatpush1.msra.mxu0 %v282
        %316 = vmatprep.subr.mxu0 %v285
        %317 = vmatpush1.msra.mxu0 %v284
        %318 = vmatprep.subr.mxu0 %v287
        %319 = vmatpush1.msra.mxu0 %v286
        %320 = vmatprep.subr.mxu0 %v289
        %321 = vmatpush1.msra.mxu0 %v288
        %322 = vmatprep.subr.mxu0 %v291
        %323 = vmatpush1.msra.mxu0 %v290
        %324 = vmatprep.subr.mxu0 %v293
        %325 = vmatpush1.msra.mxu0 %v292
        %326 = vmatprep.subr.mxu0 %v295
        %327 = vmatpush1.msra.mxu0 %v294
        %328 = vmatprep.subr.mxu0 %v297
        %329 = vmatpush1.msra.mxu0 %v296
        %330 = vmatprep.subr.mxu0 %v299
        %331 = vmatpush1.msra.mxu0 %v298
        %332 = vmatprep.subr.mxu0 %v301
        %333 = vmatpush1.msra.mxu0 %v300
        %334 = vmatprep.subr.mxu0 %v303
        %335 = vmatpush1.msra.mxu0 %v302
        %336 = vmatprep.subr.mxu0 %v305
        %337 = vmatpush1.msra.mxu0 %v304
        %338 = vmatprep.subr.mxu0 %v307
        %339 = vmatpush1.msra.mxu0 %v306
        %340 = vmatprep.subr.mxu0 %v309
        %341 = vmatpush1.msra.mxu0 %v308
        %342 = vmatprep.subr.mxu0 0.0
        %343 = vmatpush1.msra.mxu0 0.0
        %344 = vmatprep.subr.mxu0 0.0
        %345 = vmatpush1.msra.mxu0 0.0
        %346 = vmatprep.subr.mxu0 0.0
        %347 = vmatpush1.msra.mxu0 0.0
        %348 = vmatprep.subr.mxu0 0.0
        %349 = vmatpush1.msra.mxu0 0.0
        %350 = vmatprep.subr.mxu0 0.0
        %351 = vmatpush1.msra.mxu0 0.0
        %352 = vmatprep.subr.mxu0 0.0
        %353 = vmatpush1.msra.mxu0 0.0
        %354 = vmatprep.subr.mxu0 0.0
        %355 = vmatpush1.msra.mxu0 0.0
        %356 = vmatprep.subr.mxu0 0.0
        %357 = vmatpush1.msra.mxu0 0.0
        %358 = vmatprep.subr.mxu0 0.0
        %359 = vmatpush1.msra.mxu0 0.0
        %360 = vmatprep.subr.mxu0 0.0
        %361 = vmatpush1.msra.mxu0 0.0
        %362 = vmatprep.subr.mxu0 0.0
        %363 = vmatpush1.msra.mxu0 0.0
        %364 = vmatprep.subr.mxu0 0.0
        %365 = vmatpush1.msra.mxu0 0.0
        %366 = vmatprep.subr.mxu0 0.0
        %367 = vmatpush1.msra.mxu0 0.0
        %368 = vmatprep.subr.mxu0 0.0
        %369 = vmatpush1.msra.mxu0 0.0
        %370 = vmatprep.subr.mxu0 0.0
        %371 = vmatpush1.msra.mxu0 0.0
        %372 = vmatprep.subr.mxu0 0.0
        %373 = vmatpush1.msra.mxu0 0.0
        %374 = vmatprep.mubr.f32.mxu0 0.0
        %375 = vmatmul.mubr.f32.gmra.mrb[0].mxu0 %v277
        %v376 = vpop.f32.mrb[0].mxu0
        %v377 = vadd.f32 0.0, %v376
        %v378 = vpop.f32.mrb[0].mxu0
        %v379 = vadd.f32 0.0, %v378
        %380 = vdwg.mxu0
        %v381 = vxor.u32 %v379, 2147483648
        %v382 = vmul.f32 %v381, 1.442695
        %v383 = vpow.pop %v382
        %v384 = vadd.f32 %v383, 1.0
        %v385 = vrcp.pop %v384
        %v386 = vmul.f32 1.0, %v385
        %v387 = vmul.f32 %v379, %v386
        %v388 = vmul.f32 %v387, %v377
        %v389 = vld [vmem:[%s242] sm:$0xff]
        %v390 = vld [vmem:[%s242 + $0x8] sm:$0xff]
        %v391 = vld [vmem:[%s242 + $0x10] sm:$0xff]
        %v392 = vld [vmem:[%s242 + $0x18] sm:$0xff]
        %v393 = vld [vmem:[%s242 + $0x20] sm:$0xff]
        %v394 = vld [vmem:[%s242 + $0x28] sm:$0xff]
        %v395 = vld [vmem:[%s242 + $0x30] sm:$0xff]
        %v396 = vld [vmem:[%s242 + $0x38] sm:$0xff]
        %v397 = vld [vmem:[%s242 + $0x40] sm:$0xff]
        %v398 = vld [vmem:[%s242 + $0x48] sm:$0xff]
        %v399 = vld [vmem:[%s242 + $0x50] sm:$0xff]
        %v400 = vld [vmem:[%s242 + $0x58] sm:$0xff]
        %v401 = vld [vmem:[%s242 + $0x60] sm:$0xff]
        %v402 = vld [vmem:[%s242 + $0x68] sm:$0xff]
        %v403 = vld [vmem:[%s242 + $0x70] sm:$0xff]
        %v404 = vld [vmem:[%s242 + $0x78] sm:$0xff]
        %405 = vmatprep.subr.mxu0 0.0
        %406 = vmatpush1.msra.mxu0 %v389
        %407 = vmatprep.subr.mxu0 0.0
        %408 = vmatpush1.msra.mxu0 %v390
        %409 = vmatprep.subr.mxu0 0.0
        %410 = vmatpush1.msra.mxu0 %v391
        %411 = vmatprep.subr.mxu0 0.0
        %412 = vmatpush1.msra.mxu0 %v392
        %413 = vmatprep.subr.mxu0 0.0
        %414 = vmatpush1.msra.mxu0 %v393
        %415 = vmatprep.subr.mxu0 0.0
        %416 = vmatpush1.msra.mxu0 %v394
        %417 = vmatprep.subr.mxu0 0.0
        %418 = vmatpush1.msra.mxu0 %v395
        %419 = vmatprep.subr.mxu0 0.0
        %420 = vmatpush1.msra.mxu0 %v396
        %421 = vmatprep.subr.mxu0 0.0
        %422 = vmatpush1.msra.mxu0 %v397
        %423 = vmatprep.subr.mxu0 0.0
        %424 = vmatpush1.msra.mxu0 %v398
        %425 = vmatprep.subr.mxu0 0.0
        %426 = vmatpush1.msra.mxu0 %v399
        %427 = vmatprep.subr.mxu0 0.0
        %428 = vmatpush1.msra.mxu0 %v400
        %429 = vmatprep.subr.mxu0 0.0
        %430 = vmatpush1.msra.mxu0 %v401
        %431 = vmatprep.subr.mxu0 0.0
        %432 = vmatpush1.msra.mxu0 %v402
        %433 = vmatprep.subr.mxu0 0.0
        %434 = vmatpush1.msra.mxu0 %v403
        %435 = vmatprep.subr.mxu0 0.0
        %436 = vmatpush1.msra.mxu0 %v404
        %437 = vmatprep.subr.mxu0 0.0
        %438 = vmatpush1.msra.mxu0 0.0
        %439 = vmatprep.subr.mxu0 0.0
        %440 = vmatpush1.msra.mxu0 0.0
        %441 = vmatprep.subr.mxu0 0.0
        %442 = vmatpush1.msra.mxu0 0.0
        %443 = vmatprep.subr.mxu0 0.0
        %444 = vmatpush1.msra.mxu0 0.0
        %445 = vmatprep.subr.mxu0 0.0
        %446 = vmatpush1.msra.mxu0 0.0
        %447 = vmatprep.subr.mxu0 0.0
        %448 = vmatpush1.msra.mxu0 0.0
        %449 = vmatprep.subr.mxu0 0.0
        %450 = vmatpush1.msra.mxu0 0.0
        %451 = vmatprep.subr.mxu0 0.0
        %452 = vmatpush1.msra.mxu0 0.0
        %453 = vmatprep.subr.mxu0 0.0
        %454 = vmatpush1.msra.mxu0 0.0
        %455 = vmatprep.subr.mxu0 0.0
        %456 = vmatpush1.msra.mxu0 0.0
        %457 = vmatprep.subr.mxu0 0.0
        %458 = vmatpush1.msra.mxu0 0.0
        %459 = vmatprep.subr.mxu0 0.0
        %460 = vmatpush1.msra.mxu0 0.0
        %461 = vmatprep.subr.mxu0 0.0
        %462 = vmatpush1.msra.mxu0 0.0
        %463 = vmatprep.subr.mxu0 0.0
        %464 = vmatpush1.msra.mxu0 0.0
        %465 = vmatprep.subr.mxu0 0.0
        %466 = vmatpush1.msra.mxu0 0.0
        %467 = vmatprep.subr.mxu0 0.0
        %468 = vmatpush1.msra.mxu0 0.0
        %469 = vmatprep.mubr.f32.mxu0 0.0
        %470 = vmatmul.mubr.f32.gmra.mrb[0].mxu0 %v388
        %v471 = vpop.f32.mrb[0].mxu0
        %v472 = vadd.f32 0.0, %v471
        %v473 = vpop.f32.mrb[0].mxu0
        %474 = vdwg.mxu0
        %p475 = scmp.eq.s32.totalorder %s28, 0
        // Predicated region
        $region45: #{tpu_custom_call.1} parent=31 // pred_check
          %p476 = pneg %p475
        $region46: #{tpu_custom_call.1} parent=31 // pred_check_branch
          %478 = sbr.rel (%p476) target = $region48
        $region47: #{tpu_custom_call.1} parent=31 // pred_region
          %479 = vst [vmem:[#allocation2] sm:$0xff] %v472
        $region48: #{tpu_custom_call.1} parent=31 // pred_fallthru
          _
        %p480 = scmp.gt.s32.totalorder %s28, 0
        // Predicated region
        $region49: #{tpu_custom_call.1} parent=31 // pred_check
          %p481 = pneg %p480
        $region50: #{tpu_custom_call.1} parent=31 // pred_check_branch
          %483 = sbr.rel (%p481) target = $region52
        $region51: #{tpu_custom_call.1} parent=31 // pred_region
          %v484 = vld [vmem:[#allocation2] sm:$0xff]
          %v485 = vadd.f32 %v484, %v472
          %486 = vst [vmem:[#allocation2] sm:$0xff] %v485
        $region52: #{tpu_custom_call.1} parent=31 // pred_fallthru
          _
        %p487 = scmp.eq.s32.totalorder %s28, 2
        // Predicated region
        $region53: #{tpu_custom_call.1} parent=31 // pred_check
          %p488 = pneg %p487
        $region54: #{tpu_custom_call.1} parent=31 // pred_check_branch
          %490 = sbr.rel (%p488) target = $region56
        $region55: #{tpu_custom_call.1} parent=31 // pred_region
          %v491 = vld [vmem:[#allocation2] sm:$0xff]
          %492 = vst [vmem:[%s274] sm:$0xff] %v491
        $region56: #{tpu_custom_call.1} parent=31 // pred_fallthru
          _
        %s493 = sand.u32 %s121, 1
        %s494 = scalar_lea.sflag [#allocation5], %s493
        %s495 = sand.u32 %s121, 1
        %s496 = smul.addr %s495, 8
        %s497 = scalar_lea.vmem [#allocation9], %s496
        // Predicated region
        $region57: #{tpu_custom_call.1} parent=31 // pred_check
          %p498 = pneg %p131
        $region58: #{tpu_custom_call.1} parent=31 // pred_check_branch
          %500 = sbr.rel (%p498) target = $region60
        $region59: #{tpu_custom_call.1} parent=31 // pred_region
          %s502 = ssub.s32 128, 128
          %503 = vsyncadd %s494, %s502
          %s504 = smul.addr %s27, 128
          %s505 = scalar_lea.hbm %s3, %s504
          %s507 = sshll.u32 %s497, 4
          %s508 = int_to_ptr.vmem [resolvable:$true] %s507
          %510 = dma.vmem_to_hbm [thread:$0]  %s508, 128, %s505, %s494
        $region60: #{tpu_custom_call.1} parent=31 // pred_fallthru
          _
      $region32: #{tpu_custom_call.1} parent=5 // pred_fallthru
        _
      %p511 = scmp.le.s32.totalorder 2, %s18
      // Predicated region
      $region61: #{tpu_custom_call.1} parent=5 // pred_check
        %p512 = pneg %p511
      $region62: #{tpu_custom_call.1} parent=5 // pred_check_branch
        %514 = sbr.rel (%p512) target = $region64
      $region63: #{tpu_custom_call.1} parent=5 // pred_region
        %s515 = ssub.s32 %s18, 2
        // Predicated region
        $region65: #{tpu_custom_call.1} parent=63 // pred_check
          %p516 = pneg %p137
        $region66: #{tpu_custom_call.1} parent=63 // pred_check_branch
          %518 = sbr.rel (%p516) target = $region68
        $region67: #{tpu_custom_call.1} parent=63 // pred_region
          %s519 = sand.u32 %s122, 1
          %s520 = scalar_lea.sflag [#allocation5], %s519
          %s521 = sand.u32 %s122, 1
          %s522 = smul.addr %s521, 8
          %s523 = scalar_lea.vmem [#allocation9], %s522
          %524 = dma.done %s520, 128
        $region68: #{tpu_custom_call.1} parent=63 // pred_fallthru
          _
      $region64: #{tpu_custom_call.1} parent=5 // pred_fallthru
        _
    $region6: #{tpu_custom_call.1} parent=1 // loop_footer
      %s22 = sadd.s32 1, %s18
    $region7: #{tpu_custom_call.1} parent=1 // loop_footer_branch
      %17 = sbr.rel target = $region3
    $region8: #{tpu_custom_call.1} parent=1 // loop_exit
      _
    %525 = vsyncpa [#allocation4], 1
    %s526 = scalar_lea.sflag [#allocation4], 1
    %527 = vsyncpa %s526, 1
    %528 = vsyncpa [#allocation7], 1
    %s529 = scalar_lea.sflag [#allocation7], 1
    %530 = vsyncpa %s529, 1
    %531 = vsyncpa [#allocation5], 1
    %s532 = scalar_lea.sflag [#allocation5], 1
    %533 = vsyncpa %s532, 1

</llo_original>
